<compile_context>
chip_gen: v7x
topology: tpu7x:2x2x1
jax: 0.10.0
libtpu: 0.0.40
codegen_flags: <defaults>
</compile_context>

<pallas_src>
import functools

import jax
import jax.numpy as jnp
import numpy as np
from jax.experimental import pallas as pl
from jax.experimental.pallas import tpu as pltpu

C = 2               # asserted C == 2 in the module
COND_CHANNELS = 8   # self.cond_channels
HIDDEN = 32
LEAKY = 0.01
LOG_2PI = float(np.log(2.0 * np.pi))


def _leaky_relu(h):
    return jnp.where(h > 0, h, LEAKY * h)


def _softplus(h):
    # numerically stable softplus, matches torch.nn.functional.softplus
    return jnp.maximum(h, 0.0) + jnp.log1p(jnp.exp(-jnp.abs(h)))


def _mlp_mean_sigma(f, w_ref, b_ref, c):
    """Shared 1x1 MLP: (Cc, T) features -> mean (c, T), sigma (c, T).

    w_ref : (H, Cc + 2H) bf16 blob  = [w1 | w2 | w3(padded to H rows)]
    b_ref : (H, 3)       f32  blob  = [b1 | b2 | b3(padded)]
    Last layer rows are pre-deinterleaved: rows [0:c) = mean, [c:2c) = sigma.
    Matmuls run in bf16 with f32 accumulation; elementwise math stays f32.
    """
    hidden = w_ref.shape[0]
    cc = f.shape[0]

    wb = w_ref[...]                                    # tiny, load once
    bb = b_ref[...]
    w1 = wb[:, :cc]                                    # (H, Cc)  bf16
    w2 = wb[:, cc:cc + hidden]                         # (H, H)   bf16
    w3 = wb[:2 * c, cc + hidden:cc + 2 * hidden]       # (2C, H)  bf16
    b1 = bb[:, 0:1]                                    # (H, 1)   f32
    b2 = bb[:, 1:2]
    b3 = bb[:2 * c, 2:3]                               # (2C, 1)

    fb = f.astype(jnp.bfloat16)
    h = jnp.dot(w1, fb, preferred_element_type=jnp.float32) + b1
    h = _leaky_relu(h)
    h = jnp.dot(w2, h.astype(jnp.bfloat16), preferred_element_type=jnp.float32) + b2
    h = _leaky_relu(h)
    # Fused last layer: one (2C, H) x (H, T) matmul, static sublane slices
    # recover mean / sigma (no interleaved 0::2 gather).
    h3 = jnp.dot(w3, h.astype(jnp.bfloat16), preferred_element_type=jnp.float32) + b3
    mean = h3[:c, :]
    sigma = _softplus(h3[c:, :])
    return mean, sigma


def _logp_kernel(x_ref, f_ref, w_ref, b_ref, logp_ref):
    """Forward (reverse=False): emit only the per-pixel log-prob (channels summed).

    x_ref : (1, C, T)   f_ref : (1, Cc, T)   logp_ref : (1, 1, T)
    """
    c = x_ref.shape[1]
    mean, sigma = _mlp_mean_sigma(f_ref[0], w_ref, b_ref, c)

    x = x_ref[0]                                       # (C, T) f32
    diff = x - mean
    log_sigma = jnp.log(sigma)
    # 1/sigma on the EUP (approx) + one Newton refinement instead of a VPU divide.
    inv_sig = pl.reciprocal(sigma, approx=True)
    inv_sig = inv_sig * (2.0 - sigma * inv_sig)
    # ll = -0.5*(x-mean)^2/sigma^2 - 0.5*log(2*pi) - log(sigma)
    ll = -0.5 * diff * diff * (inv_sig * inv_sig) - (0.5 * LOG_2PI) - log_sigma
    logp_ref[0] = jnp.sum(ll, axis=0, keepdims=True)   # (1, T)


def _sample_kernel(f_ref, noise_ref, w_ref, b_ref, z_ref, *, eps):
    """Reverse: emit only z = mean + eps * sigma * noise (fused in-kernel)."""
    c = z_ref.shape[1]
    mean, sigma = _mlp_mean_sigma(f_ref[0], w_ref, b_ref, c)
    if eps == 0.0:
        z_ref[0] = mean
    else:
        z_ref[0] = mean + eps * sigma * noise_ref[0]


def _choose_tile(hw, b, tile_hw):
    """Lane tile (multiple of 128 or full extent) + number of spatial tiles."""
    assert tile_hw % 128 == 0, "tile_hw must be a multiple of 128"
    tile = hw if hw <= tile_hw else tile_hw
    n_t = -(-hw // tile)
    # v7x has 2 TensorCores sharded over the parallel grid axes: avoid a
    # degenerate (1, 1) grid when the spatial axis is splittable.
    if b * n_t < 2 and hw > 128:
        half = -(-hw // 2)
        tile = min(-(-half // 128) * 128, hw)
        n_t = -(-hw // tile)
    return tile, n_t


def _common_compiler_params():
    return pltpu.CompilerParams(
        # Both grid axes are independent -> shardable across TensorCores.
        dimension_semantics=("parallel", "parallel"),
        # Headroom for tile_hw sweeps while staying within v7x's 64 MiB VMEM.
        vmem_limit_bytes=48 * 1024 * 1024,
    )


@functools.partial(jax.jit, static_argnames=("tile_hw",))
def _logp_pallas(x3, f3, w_blob, b_blob, tile_hw=8192):
    """x3: (B, C, HW), f3: (B, Cc, HW) -> logp (B, 1, HW)."""
    b, c, hw = x3.shape
    cc = f3.shape[1]
    tile, n_t = _choose_tile(hw, b, tile_hw)

    grid_spec = pltpu.PrefetchScalarGridSpec(
        num_scalar_prefetch=0,
        grid=(b, n_t),
        in_specs=[
            pl.BlockSpec((1, c, tile), lambda bi, ti: (bi, 0, ti)),    # x
            pl.BlockSpec((1, cc, tile), lambda bi, ti: (bi, 0, ti)),   # features
            pl.BlockSpec(w_blob.shape, lambda bi, ti: (0, 0)),         # packed weights
            pl.BlockSpec(b_blob.shape, lambda bi, ti: (0, 0)),         # packed biases
        ],
        out_specs=pl.BlockSpec((1, 1, tile), lambda bi, ti: (bi, 0, ti)),
    )
    return pl.pallas_call(
        _logp_kernel,
        grid_spec=grid_spec,
        out_shape=jax.ShapeDtypeStruct((b, 1, hw), jnp.float32),
        compiler_params=_common_compiler_params(),
    )(x3, f3, w_blob, b_blob)


@functools.partial(jax.jit, static_argnames=("eps", "tile_hw"))
def _sample_pallas(f3, noise3, w_blob, b_blob, eps, tile_hw=8192):
    """f3: (B, Cc, HW), noise3: (B, C, HW) -> z (B, C, HW)."""
    b, c, hw = noise3.shape
    cc = f3.shape[1]
    tile, n_t = _choose_tile(hw, b, tile_hw)

    grid_spec = pltpu.PrefetchScalarGridSpec(
        num_scalar_prefetch=0,
        grid=(b, n_t),
        in_specs=[
            pl.BlockSpec((1, cc, tile), lambda bi, ti: (bi, 0, ti)),   # features
            pl.BlockSpec((1, c, tile), lambda bi, ti: (bi, 0, ti)),    # noise
            pl.BlockSpec(w_blob.shape, lambda bi, ti: (0, 0)),
            pl.BlockSpec(b_blob.shape, lambda bi, ti: (0, 0)),
        ],
        out_specs=pl.BlockSpec((1, c, tile), lambda bi, ti: (bi, 0, ti)),
    )
    return pl.pallas_call(
        functools.partial(_sample_kernel, eps=eps),
        grid_spec=grid_spec,
        out_shape=jax.ShapeDtypeStruct((b, c, hw), jnp.float32),
        compiler_params=_common_compiler_params(),
    )(f3, noise3, w_blob, b_blob)


def gaussian_prior_forward(x, lr_feat_map, eps, reverse, params,
                           logpz=0.0, logdet=0.0, noise=None, tile_hw=8192):
    """Mirrors GaussianPrior.forward (final=True)."""
    b, c, h, w = x.shape
    hw = h * w
    cc = lr_feat_map.shape[1]
    w_blob, b_blob = params

    # Channel-major reshapes only -- no transposes, no extra HBM passes.
    # bf16 feature maps are accepted as-is (kernel casts for the MXU anyway).
    if lr_feat_map.dtype not in (jnp.float32, jnp.bfloat16):
        lr_feat_map = lr_feat_map.astype(jnp.float32)
    f3 = lr_feat_map.reshape(b, cc, hw)

    if not reverse:
        x3 = x.reshape(b, c, hw).astype(jnp.float32)
        logp3 = _logp_pallas(x3, f3, w_blob, b_blob, tile_hw=tile_hw)
        logpz = logpz + logp3.reshape(b, h, w)   # torch.sum(ll, [1]) on (B,C,H,W)
        z = x
    else:
        if noise is None:
            # TODO(synk): caller should supply randn noise to match torch.randn_like
            noise3 = jnp.zeros((b, c, hw), jnp.float32)
        else:
            noise3 = noise.reshape(b, c, hw).astype(jnp.float32)
        z3 = _sample_pallas(f3, noise3, w_blob, b_blob, float(eps), tile_hw=tile_hw)
        z = z3.reshape(b, c, h, w)
    return z, logdet, logpz


def pack_params(raw, c=C):
    """PyTorch-layout params -> kernel-layout packed blobs.

    Weights are transposed to (out, in), the last layer is de-interleaved
    (even cols -> mean rows, odd cols -> sigma rows), everything is packed
    into one bf16 weight blob (H, Cc + 2H) and one f32 bias blob (H, 3).
    """
    w1, b1, w2, b2, w3, b3 = raw
    cond_channels, hidden = w1.shape

    w3_re = jnp.concatenate([w3[:, 0::2], w3[:, 1::2]], axis=1)   # (hidden, 2C)
    b3_re = jnp.concatenate([b3[0::2], b3[1::2]], axis=0)         # (2C,)

    w3_pad = jnp.zeros((hidden, hidden), jnp.float32).at[:2 * c, :].set(w3_re.T)
    w_blob = jnp.concatenate([w1.T, w2.T, w3_pad], axis=1).astype(jnp.bfloat16)

    b3_pad = jnp.zeros((hidden,), jnp.float32).at[:2 * c].set(b3_re)
    b_blob = jnp.stack([b1, b2, b3_pad], axis=1).astype(jnp.float32)  # (hidden, 3)
    return w_blob, b_blob


def init_params(key, cond_channels=COND_CHANNELS, hidden=HIDDEN, c=C):
    """Deterministic MLP params for layers [cond_channels, hidden, hidden, 2*C]."""
    ks = jax.random.split(key, 6)
    scale = 0.1
    w1 = scale * jax.random.normal(ks[0], (cond_channels, hidden), jnp.float32)
    b1 = scale * jax.random.normal(ks[1], (hidden,), jnp.float32)
    w2 = scale * jax.random.normal(ks[2], (hidden, hidden), jnp.float32)
    b2 = scale * jax.random.normal(ks[3], (hidden,), jnp.float32)
    w3 = scale * jax.random.normal(ks[4], (hidden, 2 * c), jnp.float32)
    b3 = scale * jax.random.normal(ks[5], (2 * c,), jnp.float32)
    raw = (w1, b1, w2, b2, w3, b3)
    return pack_params(raw, c=c), raw


def reference_forward(x, lr_feat_map, raw_params):
    """Pure-JAX f32 reference matching the PyTorch module semantics (reverse=False)."""
    w1, b1, w2, b2, w3, b3 = raw_params
    f = jnp.transpose(lr_feat_map, (0, 2, 3, 1))          # (B, H, W, Cc)
    h = f @ w1 + b1
    h = jnp.where(h > 0, h, LEAKY * h)
    h = h @ w2 + b2
    h = jnp.where(h > 0, h, LEAKY * h)
    h = h @ w3 + b3                                       # (B, H, W, 2C)
    mean = jnp.transpose(h[..., 0::2], (0, 3, 1, 2))
    sigma = jnp.transpose(jax.nn.softplus(h[..., 1::2]), (0, 3, 1, 2))
    ll = -0.5 * (x - mean) ** 2 / sigma ** 2 - 0.5 * jnp.log(2 * np.pi * sigma ** 2)
    return jnp.sum(ll, axis=1), mean, sigma               # (B, H, W), NCHW, NCHW


if __name__ == "__main__":
    key = jax.random.PRNGKey(0)
    k_x, k_f, k_p = jax.random.split(key, 3)

    B, H, W = 2, 16, 16
    x = jax.random.normal(k_x, (B, C, H, W), jnp.float32)
    lr_feat_map = jax.random.normal(k_f, (B, COND_CHANNELS, H, W), jnp.float32)

    params, raw_params = init_params(k_p)

    # forward (reverse=False): z passthrough + log-prob accumulation
    z, logdet, logpz = gaussian_prior_forward(
        x, lr_feat_map, eps=0.0, reverse=False, params=params, logpz=0.0, logdet=0.0)
    jax.block_until_ready((z, logpz))

    # correctness check against a pure-JAX f32 reference
    # (tolerance loosened because the kernel's matmuls use bf16 operands).
    logpz_ref, mean_ref, sigma_ref = reference_forward(x, lr_feat_map, raw_params)
    np.testing.assert_allclose(np.asarray(logpz), np.asarray(logpz_ref),
                               rtol=5e-2, atol=5e-2)
    np.testing.assert_allclose(np.asarray(z), np.asarray(x), rtol=0, atol=0)

    # reverse path with eps=0 -> z == mean (exercises the sampling kernel)
    z_rev, _, _ = gaussian_prior_forward(
        x, lr_feat_map, eps=0.0, reverse=True, params=params)
    jax.block_until_ready(z_rev)
    np.testing.assert_allclose(np.asarray(z_rev), np.asarray(mean_ref),
                               rtol=1e-2, atol=1e-2)

    print("KERNEL_OK")
</pallas_src>

<mosaic_0001>
module attributes {stable_mosaic.version = 11 : i64} {
  func.func @_logp_kernel(%arg0: i32, %arg1: i32, %arg2: memref<1x2x256xf32, #tpu.memory_space<vmem>>, %arg3: memref<1x8x256xf32, #tpu.memory_space<vmem>>, %arg4: memref<32x72xbf16, #tpu.memory_space<vmem>>, %arg5: memref<32x3xf32, #tpu.memory_space<vmem>>, %arg6: memref<1x1x256xf32, #tpu.memory_space<vmem>>) attributes {dimension_semantics = [#tpu.dimension_semantics<parallel>, #tpu.dimension_semantics<parallel>], iteration_bounds = array<i64: 2, 1>, scalar_prefetch = 0 : i64, scratch_operands = 0 : i64, tpu.core_type = #tpu.core_type<tc>, window_params = [{transform_indices = @transform_0, window_bounds = array<i64: 1, 2, 256>}, {transform_indices = @transform_1, window_bounds = array<i64: 1, 8, 256>}, {pipeline_mode = #tpu.pipeline_mode<synchronous>, transform_indices = @transform_2, window_bounds = array<i64: 32, 72>}, {pipeline_mode = #tpu.pipeline_mode<synchronous>, transform_indices = @transform_3, window_bounds = array<i64: 32, 3>}, {transform_indices = @transform_4, window_bounds = array<i64: 1, 1, 256>}]} {
    %c0 = arith.constant 0 : index
    %c0_0 = arith.constant 0 : index
    %c0_1 = arith.constant 0 : index
    %0 = vector.load %arg3[%c0, %c0_0, %c0_1] : memref<1x8x256xf32, #tpu.memory_space<vmem>>, vector<1x8x256xf32>
    %1 = vector.shape_cast %0 : vector<1x8x256xf32> to vector<8x256xf32>
    %c0_2 = arith.constant 0 : index
    %c0_3 = arith.constant 0 : index
    %2 = vector.load %arg4[%c0_2, %c0_3] : memref<32x72xbf16, #tpu.memory_space<vmem>>, vector<32x72xbf16>
    %c0_4 = arith.constant 0 : index
    %c0_5 = arith.constant 0 : index
    %3 = vector.load %arg5[%c0_4, %c0_5] : memref<32x3xf32, #tpu.memory_space<vmem>>, vector<32x3xf32>
    %4 = vector.extract_strided_slice %2 {offsets = [0, 0], sizes = [32, 8], strides = [1, 1]} : vector<32x72xbf16> to vector<32x8xbf16>
    %5 = vector.extract_strided_slice %2 {offsets = [0, 8], sizes = [32, 32], strides = [1, 1]} : vector<32x72xbf16> to vector<32x32xbf16>
    %6 = vector.extract_strided_slice %2 {offsets = [0, 40], sizes = [4, 32], strides = [1, 1]} : vector<32x72xbf16> to vector<4x32xbf16>
    %7 = vector.extract_strided_slice %3 {offsets = [0, 0], sizes = [32, 1], strides = [1, 1]} : vector<32x3xf32> to vector<32x1xf32>
    %8 = vector.extract_strided_slice %3 {offsets = [0, 1], sizes = [32, 1], strides = [1, 1]} : vector<32x3xf32> to vector<32x1xf32>
    %9 = vector.extract_strided_slice %3 {offsets = [0, 2], sizes = [4, 1], strides = [1, 1]} : vector<32x3xf32> to vector<4x1xf32>
    %10 = arith.truncf %1 : vector<8x256xf32> to vector<8x256xbf16>
    %cst = arith.constant dense<0.000000e+00> : vector<32x256xf32>
    %11 = tpu.matmul %4, %10, %cst {dimension_numbers = #tpu.dot_dimension_numbers<[1], [0], [0], [1], [0, 0, 1, 1], [], []>} : vector<32x8xbf16>, vector<8x256xbf16>, vector<32x256xf32> -> vector<32x256xf32>
    %12 = vector.broadcast %7 : vector<32x1xf32> to vector<32x256xf32>
    %13 = arith.addf %11, %12 : vector<32x256xf32>
    %cst_6 = arith.constant 0.000000e+00 : f32
    %14 = vector.broadcast %cst_6 : f32 to vector<32x256xf32>
    %15 = arith.cmpf ogt, %13, %14 : vector<32x256xf32>
    %cst_7 = arith.constant 0.00999999977 : f32
    %16 = vector.broadcast %cst_7 : f32 to vector<32x256xf32>
    %17 = arith.mulf %16, %13 : vector<32x256xf32>
    %18 = arith.select %15, %13, %17 : vector<32x256xi1>, vector<32x256xf32>
    %19 = arith.truncf %18 : vector<32x256xf32> to vector<32x256xbf16>
    %cst_8 = arith.constant dense<0.000000e+00> : vector<32x256xf32>
    %20 = tpu.matmul %5, %19, %cst_8 {dimension_numbers = #tpu.dot_dimension_numbers<[1], [0], [0], [1], [0, 0, 1, 1], [], []>} : vector<32x32xbf16>, vector<32x256xbf16>, vector<32x256xf32> -> vector<32x256xf32>
    %21 = vector.broadcast %8 : vector<32x1xf32> to vector<32x256xf32>
    %22 = arith.addf %20, %21 : vector<32x256xf32>
    %cst_9 = arith.constant 0.000000e+00 : f32
    %23 = vector.broadcast %cst_9 : f32 to vector<32x256xf32>
    %24 = arith.cmpf ogt, %22, %23 : vector<32x256xf32>
    %cst_10 = arith.constant 0.00999999977 : f32
    %25 = vector.broadcast %cst_10 : f32 to vector<32x256xf32>
    %26 = arith.mulf %25, %22 : vector<32x256xf32>
    %27 = arith.select %24, %22, %26 : vector<32x256xi1>, vector<32x256xf32>
    %28 = arith.truncf %27 : vector<32x256xf32> to vector<32x256xbf16>
    %cst_11 = arith.constant dense<0.000000e+00> : vector<4x256xf32>
    %29 = tpu.matmul %6, %28, %cst_11 {dimension_numbers = #tpu.dot_dimension_numbers<[1], [0], [0], [1], [0, 0, 1, 1], [], []>} : vector<4x32xbf16>, vector<32x256xbf16>, vector<4x256xf32> -> vector<4x256xf32>
    %30 = vector.broadcast %9 : vector<4x1xf32> to vector<4x256xf32>
    %31 = arith.addf %29, %30 : vector<4x256xf32>
    %32 = vector.extract_strided_slice %31 {offsets = [0, 0], sizes = [2, 256], strides = [1, 1]} : vector<4x256xf32> to vector<2x256xf32>
    %33 = vector.extract_strided_slice %31 {offsets = [2, 0], sizes = [2, 256], strides = [1, 1]} : vector<4x256xf32> to vector<2x256xf32>
    %cst_12 = arith.constant 0.000000e+00 : f32
    %34 = vector.broadcast %cst_12 : f32 to vector<2x256xf32>
    %35 = arith.maximumf %33, %34 : vector<2x256xf32>
    %36 = math.absf %33 : vector<2x256xf32>
    %cst_13 = arith.constant 0.000000e+00 : f32
    %37 = vector.broadcast %cst_13 : f32 to vector<2x256xf32>
    %38 = arith.subf %37, %36 : vector<2x256xf32>
    %39 = math.exp %38 : vector<2x256xf32>
    %40 = math.log1p %39 : vector<2x256xf32>
    %41 = arith.addf %35, %40 : vector<2x256xf32>
    %c0_14 = arith.constant 0 : index
    %c0_15 = arith.constant 0 : index
    %c0_16 = arith.constant 0 : index
    %42 = vector.load %arg2[%c0_14, %c0_15, %c0_16] : memref<1x2x256xf32, #tpu.memory_space<vmem>>, vector<1x2x256xf32>
    %43 = vector.shape_cast %42 : vector<1x2x256xf32> to vector<2x256xf32>
    %44 = arith.subf %43, %32 : vector<2x256xf32>
    %45 = math.log %41 : vector<2x256xf32>
    %46 = tpu.reciprocal %41 {approx = true} : vector<2x256xf32> -> vector<2x256xf32>
    %47 = arith.mulf %41, %46 : vector<2x256xf32>
    %cst_17 = arith.constant 2.000000e+00 : f32
    %48 = vector.broadcast %cst_17 : f32 to vector<2x256xf32>
    %49 = arith.subf %48, %47 : vector<2x256xf32>
    %50 = arith.mulf %46, %49 : vector<2x256xf32>
    %cst_18 = arith.constant -5.000000e-01 : f32
    %51 = vector.broadcast %cst_18 : f32 to vector<2x256xf32>
    %52 = arith.mulf %51, %44 : vector<2x256xf32>
    %53 = arith.mulf %52, %44 : vector<2x256xf32>
    %54 = arith.mulf %50, %50 : vector<2x256xf32>
    %55 = arith.mulf %53, %54 : vector<2x256xf32>
    %cst_19 = arith.constant 0.918938517 : f32
    %56 = vector.broadcast %cst_19 : f32 to vector<2x256xf32>
    %57 = arith.subf %55, %56 : vector<2x256xf32>
    %58 = arith.subf %57, %45 : vector<2x256xf32>
    %cst_20 = arith.constant dense<0.000000e+00> : vector<256xf32>
    %59 = vector.multi_reduction <add>, %58, %cst_20 [0] : vector<2x256xf32> to vector<256xf32>
    %60 = vector.shape_cast %59 : vector<256xf32> to vector<1x256xf32>
    %c0_21 = arith.constant 0 : index
    %c0_22 = arith.constant 0 : index
    %c0_23 = arith.constant 0 : index
    %61 = vector.load %arg6[%c0_21, %c0_22, %c0_23] : memref<1x1x256xf32, #tpu.memory_space<vmem>>, vector<1x1x256xf32>
    %62 = vector.shape_cast %61 : vector<1x1x256xf32> to vector<1x256xf32>
    %63 = vector.shape_cast %60 : vector<1x256xf32> to vector<1x1x256xf32>
    tpu.vector_store %arg6[%c0_21, %c0_22, %c0_23], %63 {strides = array<i32>} : memref<1x1x256xf32, #tpu.memory_space<vmem>>, vector<1x1x256xf32>,
    return
  }
  func.func @transform_0(%arg0: i32, %arg1: i32) -> (i32, i32, i32) {
    %c0_i32 = arith.constant 0 : i32
    %c0_i32_0 = arith.constant 0 : i32
    return %arg0, %c0_i32, %arg1 : i32, i32, i32
  }
  func.func @transform_1(%arg0: i32, %arg1: i32) -> (i32, i32, i32) {
    %c0_i32 = arith.constant 0 : i32
    %c0_i32_0 = arith.constant 0 : i32
    return %arg0, %c0_i32, %arg1 : i32, i32, i32
  }
  func.func @transform_2(%arg0: i32, %arg1: i32) -> (i32, i32) {
    %c0_i32 = arith.constant 0 : i32
    %c0_i32_0 = arith.constant 0 : i32
    %c0_i32_1 = arith.constant 0 : i32
    return %c0_i32, %c0_i32_0 : i32, i32
  }
  func.func @transform_3(%arg0: i32, %arg1: i32) -> (i32, i32) {
    %c0_i32 = arith.constant 0 : i32
    %c0_i32_0 = arith.constant 0 : i32
    %c0_i32_1 = arith.constant 0 : i32
    return %c0_i32, %c0_i32_0 : i32, i32
  }
  func.func @transform_4(%arg0: i32, %arg1: i32) -> (i32, i32, i32) {
    %c0_i32 = arith.constant 0 : i32
    %c0_i32_0 = arith.constant 0 : i32
    return %arg0, %c0_i32, %arg1 : i32, i32, i32
  }
}

</mosaic_0001>

<llo_original>
// kernel: _logp_pallas.1
$region0: #{_logp_pallas.1}
  #allocation0 [shape = 'u32[]', space=smem, size = 0x4, offset = 0x4, fixed_abs, tag = 'smem constant byte address 0x4 - core index']
  #allocation1 [shape = 'u32[144,128]{1,0:T(1,128)}', space=vmem, size = 0x12000, scoped, tag = 'internal scratch']
  %s0 = inlined_call_operand.hbm [shape: f32[2,2,256], index: 0, kind: input, shape index: {}]
  %s1 = inlined_call_operand.vmem [shape: f32[2,8,256], index: 1, kind: input, shape index: {}]
  %s2 = inlined_call_operand.hbm [shape: bf16[32,72], index: 2, kind: input, shape index: {}]
  %s3 = inlined_call_operand.vmem [shape: f32[32,3], index: 3, kind: input, shape index: {}]
  %s4 = inlined_call_operand.hbm [shape: f32[2,1,256], index: 4, kind: output, shape index: {}]
  %s5 = sld [smem:[#allocation0]]
  $region57: #{_logp_pallas.1} parent=0
    _
  %s7 = ssub.s32 1, %s5
  %s8 = scalar_select 0, %s7, %s5
  $region1: #{_logp_pallas.1} parent=0
    #allocation2 [shape = 'u8[4096]{0}', space=vmem, size = 0x1000, scoped, tag = 'input window, operand 0']
    #allocation3 [shape = 's32[2]{0}', space=sflag, size = 0x8, scoped, tag = 'scoped memory for _logp_pallas.1']
    #allocation4 [shape = 's32[2]{0}', space=sflag, size = 0x8, scoped, tag = 'scoped memory for _logp_pallas.1']
    #allocation5 [shape = 'u8[8192]{0}', space=vmem, size = 0x2000, scoped, tag = 'input window, operand 2, single buffered']
    #allocation6 [shape = 's32[1]{0}', space=sflag, size = 0x4, scoped, tag = 'scoped memory for _logp_pallas.1']
    #allocation7 [shape = 'u8[2048]{0}', space=vmem, size = 0x800, scoped, tag = 'output window, operand 0']
    %9 = vsyncpa [#allocation3], 0
    %s10 = scalar_lea.sflag [#allocation3], 1
    %11 = vsyncpa %s10, 0
    %12 = vsyncpa [#allocation6], 0
    %13 = vsyncpa [#allocation4], 0
    %s14 = scalar_lea.sflag [#allocation4], 1
    %15 = vsyncpa %s14, 0
    loop: start=0, step=1, limit=4
    $region2: #{_logp_pallas.1} parent=1 // loop_pre_header
      _
    $region3: #{_logp_pallas.1} parent=1 // loop_header
      %s17 = sphi 0, %s21
      %p18 = scmp.ge.s32.totalorder %s17, 4
      %s24 = sphi 0, %s36
      %s25 = sphi 0, %s32
      %s26 = sphi 0, %s24
      %s27 = sphi 0, %s25
      %s28 = sphi 0, %s26
      %s29 = sphi 0, %s27
      %s41 = sphi 0, %s43
      %s44 = sphi 0, %s41
      %s45 = sphi 0, %s44
      %s61 = sphi 0, %s45
      %s69 = sphi 0, %s71
      %s72 = sphi 0, %s69
      %s73 = sphi 0, %s72
      %s89 = sphi 0, %s73
      %s93 = sphi 0, %s93
      %s95 = sphi 0, %s93
      %s96 = sphi 0, %s95
      %s110 = sphi 0, %s96
      %s114 = sphi 0, %s114
      %s116 = sphi 0, %s114
      %s117 = sphi 0, %s116
      %s131 = sphi 0, %s117
      %s139 = sphi 0, %s141
      %s142 = sphi 0, %s139
      %s143 = sphi 0, %s142
      %s159 = sphi 0, %s143
    $region4: #{_logp_pallas.1} parent=1 // loop_header_branch
      %20 = sbr.rel (%p18) target = $region8
    $region5: #{_logp_pallas.1} parent=1 // loop_body
      %s22 = ssub.s32 %s17, 1
      %s23 = ssub.s32 %s17, 2
      %s30 = sadd.s32 1, %s25
      %p31 = scmp.ge.s32.totalorder %s30, 1
      %s32 = scalar_select %p31, 0, %s30
      %s33 = sadd.s32 1, %s24
      %s34 = scalar_select %p31, %s33, %s24
      %p35 = scmp.ge.s32.totalorder %s34, 2
      %s36 = scalar_select %p35, 0, %s34
      %s37 = ssub.s32 %s24, %s36
      %s38 = ssub.s32 %s25, %s32
      %s39 = sor.u32 %s37, %s38
      %p40 = scmp.eq.s32.totalorder %s39, 0
      %s42 = sadd.s32 %s41, 1
      %s43 = scalar_select %p40, %s41, %s42
      %p46 = pneg %p40
      %p47 = scmp.eq.s32.totalorder %s17, 1
      %p48 = por %p46, %p47
      %p49 = scmp.ne.s32.totalorder %s41, %s44
      %p50 = scmp.eq.s32.totalorder %s17, 0
      %p51 = por %p49, %p50
      %p52 = scmp.ne.s32.totalorder %s41, %s44
      %p53 = scmp.eq.s32.totalorder %s22, 1
      %p54 = por %p52, %p53
      %p55 = scmp.ne.s32.totalorder %s44, %s45
      %p56 = scmp.eq.s32.totalorder %s22, 0
      %p57 = por %p55, %p56
      %p58 = scmp.ne.s32.totalorder %s44, %s45
      %p59 = scmp.eq.s32.totalorder %s23, 1
      %p60 = por %p58, %p59
      %p62 = scmp.ne.s32.totalorder %s45, %s61
      %p63 = scmp.eq.s32.totalorder %s23, 0
      %p64 = por %p62, %p63
      %s65 = ssub.s32 %s24, %s36
      %s66 = ssub.s32 %s25, %s32
      %s67 = sor.u32 %s65, %s66
      %p68 = scmp.eq.s32.totalorder %s67, 0
      %s70 = sadd.s32 %s69, 1
      %s71 = scalar_select %p68, %s69, %s70
      %p74 = pneg %p68
      %p75 = scmp.eq.s32.totalorder %s17, 1
      %p76 = por %p74, %p75
      %p77 = scmp.ne.s32.totalorder %s69, %s72
      %p78 = scmp.eq.s32.totalorder %s17, 0
      %p79 = por %p77, %p78
      %p80 = scmp.ne.s32.totalorder %s69, %s72
      %p81 = scmp.eq.s32.totalorder %s22, 1
      %p82 = por %p80, %p81
      %p83 = scmp.ne.s32.totalorder %s72, %s73
      %p84 = scmp.eq.s32.totalorder %s22, 0
      %p85 = por %p83, %p84
      %p86 = scmp.ne.s32.totalorder %s72, %s73
      %p87 = scmp.eq.s32.totalorder %s23, 1
      %p88 = por %p86, %p87
      %p90 = scmp.ne.s32.totalorder %s73, %s89
      %p91 = scmp.eq.s32.totalorder %s23, 0
      %p92 = por %p90, %p91
      %s94 = sadd.s32 %s93, 1
      %p97 = scmp.eq.s32.totalorder %s17, 1
      %p98 = scmp.ne.s32.totalorder %s93, %s95
      %p99 = scmp.eq.s32.totalorder %s17, 0
      %p100 = por %p98, %p99
      %p101 = scmp.ne.s32.totalorder %s93, %s95
      %p102 = scmp.eq.s32.totalorder %s22, 1
      %p103 = por %p101, %p102
      %p104 = scmp.ne.s32.totalorder %s95, %s96
      %p105 = scmp.eq.s32.totalorder %s22, 0
      %p106 = por %p104, %p105
      %p107 = scmp.ne.s32.totalorder %s95, %s96
      %p108 = scmp.eq.s32.totalorder %s23, 1
      %p109 = por %p107, %p108
      %p111 = scmp.ne.s32.totalorder %s96, %s110
      %p112 = scmp.eq.s32.totalorder %s23, 0
      %p113 = por %p111, %p112
      %s115 = sadd.s32 %s114, 1
      %p118 = scmp.eq.s32.totalorder %s17, 1
      %p119 = scmp.ne.s32.totalorder %s114, %s116
      %p120 = scmp.eq.s32.totalorder %s17, 0
      %p121 = por %p119, %p120
      %p122 = scmp.ne.s32.totalorder %s114, %s116
      %p123 = scmp.eq.s32.totalorder %s22, 1
      %p124 = por %p122, %p123
      %p125 = scmp.ne.s32.totalorder %s116, %s117
      %p126 = scmp.eq.s32.totalorder %s22, 0
      %p127 = por %p125, %p126
      %p128 = scmp.ne.s32.totalorder %s116, %s117
      %p129 = scmp.eq.s32.totalorder %s23, 1
      %p130 = por %p128, %p129
      %p132 = scmp.ne.s32.totalorder %s117, %s131
      %p133 = scmp.eq.s32.totalorder %s23, 0
      %p134 = por %p132, %p133
      %s135 = ssub.s32 %s24, %s36
      %s136 = ssub.s32 %s25, %s32
      %s137 = sor.u32 %s135, %s136
      %p138 = scmp.eq.s32.totalorder %s137, 0
      %s140 = sadd.s32 %s139, 1
      %s141 = scalar_select %p138, %s139, %s140
      %p144 = pneg %p138
      %p145 = scmp.eq.s32.totalorder %s17, 1
      %p146 = por %p144, %p145
      %p147 = scmp.ne.s32.totalorder %s139, %s142
      %p148 = scmp.eq.s32.totalorder %s17, 0
      %p149 = por %p147, %p148
      %p150 = scmp.ne.s32.totalorder %s139, %s142
      %p151 = scmp.eq.s32.totalorder %s22, 1
      %p152 = por %p150, %p151
      %p153 = scmp.ne.s32.totalorder %s142, %s143
      %p154 = scmp.eq.s32.totalorder %s22, 0
      %p155 = por %p153, %p154
      %p156 = scmp.ne.s32.totalorder %s142, %s143
      %p157 = scmp.eq.s32.totalorder %s23, 1
      %p158 = por %p156, %p157
      %p160 = scmp.ne.s32.totalorder %s143, %s159
      %p161 = scmp.eq.s32.totalorder %s23, 0
      %p162 = por %p160, %p161
      %p163 = scmp.le.s32.totalorder 1, %s17
      %p164 = scmp.lt.s32.totalorder %s17, 3
      %p165 = pnand %p163, %p164
      %p166 = pneg %p165
      // Predicated region
      $region9: #{_logp_pallas.1} parent=5 // pred_check
        _
      $region10: #{_logp_pallas.1} parent=5 // pred_check_branch
        %168 = sbr.rel (%p165) target = $region12
      $region11: #{_logp_pallas.1} parent=5 // pred_region
        %s169 = ssub.s32 %s17, 1
        // Predicated region
        $region13: #{_logp_pallas.1} parent=11 // pred_check
          %p170 = pneg %p106
        $region14: #{_logp_pallas.1} parent=11 // pred_check_branch
          %172 = sbr.rel (%p170) target = $region16
        $region15: #{_logp_pallas.1} parent=11 // pred_region
          %s174 = ssub.s32 256, 256
          %175 = vsyncadd [#allocation6], %s174
          %s176 = sshll.u32 [#allocation5], 4
          %s177 = int_to_ptr.vmem [resolvable:$true] %s176
          %182 = dma.hbm_to_vmem [thread:$0]  %s2, 256, %s177, [#allocation6], 64, 64, 4
        $region16: #{_logp_pallas.1} parent=11 // pred_fallthru
          _
        // Predicated region
        $region17: #{_logp_pallas.1} parent=11 // pred_check
          %p183 = pneg %p127
        $region18: #{_logp_pallas.1} parent=11 // pred_check_branch
          %185 = sbr.rel (%p183) target = $region20
        $region19: #{_logp_pallas.1} parent=11 // pred_region
          _
        $region20: #{_logp_pallas.1} parent=11 // pred_fallthru
          _
      $region12: #{_logp_pallas.1} parent=5 // pred_fallthru
        _
      %p186 = scmp.lt.s32.totalorder %s17, 2
      // Predicated region
      $region21: #{_logp_pallas.1} parent=5 // pred_check
        %p187 = pneg %p186
      $region22: #{_logp_pallas.1} parent=5 // pred_check_branch
        %189 = sbr.rel (%p187) target = $region24
      $region23: #{_logp_pallas.1} parent=5 // pred_region
        // Predicated region
        $region25: #{_logp_pallas.1} parent=23 // pred_check
          %p190 = pneg %p51
        $region26: #{_logp_pallas.1} parent=23 // pred_check_branch
          %192 = sbr.rel (%p190) target = $region28
        $region27: #{_logp_pallas.1} parent=23 // pred_region
          %s193 = sand.u32 %s41, 1
          %s194 = scalar_lea.sflag [#allocation3], %s193
          %s195 = sand.u32 %s41, 1
          %s196 = smul.addr %s195, 4
          %s197 = scalar_lea.vmem [#allocation2], %s196
          %s198 = smul.u32 2, %s25
          %s200 = ssub.s32 64, 64
          %201 = vsyncadd %s194, %s200
          %s202 = smul.addr %s24, 2
          %s203 = sadd.s32 %s198, %s202
          %s204 = smul.addr %s203, 32
          %s205 = scalar_lea.hbm %s0, %s204
          %s207 = sshll.u32 %s197, 4
          %s208 = int_to_ptr.vmem [resolvable:$true] %s207
          %210 = dma.hbm_to_vmem [thread:$0]  %s205, 64, %s208, %s194
        $region28: #{_logp_pallas.1} parent=23 // pred_fallthru
          _
        // Predicated region
        $region29: #{_logp_pallas.1} parent=23 // pred_check
          %p211 = pneg %p79
        $region30: #{_logp_pallas.1} parent=23 // pred_check_branch
          %213 = sbr.rel (%p211) target = $region32
        $region31: #{_logp_pallas.1} parent=23 // pred_region
          %s214 = smul.u32 2, %s25
          %p215 = scmp.lt.s32.totalorder %s24, 1
          %s216 = scalar_select %p215, %s24, 1
          %p217 = scmp.lt.s32.totalorder %s214, 1
          %s218 = scalar_select %p217, %s214, 1
          %s219 = smul.addr %s216, 2
          %s220 = sadd.s32 %s218, %s219
          %s221 = smul.addr %s220, 8
          %s222 = scalar_lea.vmem %s1, %s221
          %s223 = smul.u32 2, %s25
        $region32: #{_logp_pallas.1} parent=23 // pred_fallthru
          _
      $region24: #{_logp_pallas.1} parent=5 // pred_fallthru
        _
      %p224 = scmp.le.s32.totalorder 1, %s17
      %p225 = scmp.lt.s32.totalorder %s17, 3
      %p226 = pnand %p224, %p225
      %p227 = pneg %p226
      // Predicated region
      $region33: #{_logp_pallas.1} parent=5 // pred_check
        _
      $region34: #{_logp_pallas.1} parent=5 // pred_check_branch
        %229 = sbr.rel (%p226) target = $region36
      $region35: #{_logp_pallas.1} parent=5 // pred_region
        %s230 = ssub.s32 %s17, 1
        %s231 = sand.u32 %s44, 1
        %s232 = scalar_lea.sflag [#allocation3], %s231
        %s233 = sand.u32 %s44, 1
        %s234 = smul.addr %s233, 4
        %s235 = scalar_lea.vmem [#allocation2], %s234
        // Predicated region
        $region37: #{_logp_pallas.1} parent=35 // pred_check
          %p236 = pneg %p57
        $region38: #{_logp_pallas.1} parent=35 // pred_check_branch
          %238 = sbr.rel (%p236) target = $region40
        $region39: #{_logp_pallas.1} parent=35 // pred_region
          %239 = dma.done %s232, 64
        $region40: #{_logp_pallas.1} parent=35 // pred_fallthru
          _
        // Predicated region
        $region41: #{_logp_pallas.1} parent=35 // pred_check
          %p240 = pneg %p106
        $region42: #{_logp_pallas.1} parent=35 // pred_check_branch
          %242 = sbr.rel (%p240) target = $region44
        $region43: #{_logp_pallas.1} parent=35 // pred_region
          %243 = dma.done [#allocation6], 256
        $region44: #{_logp_pallas.1} parent=35 // pred_fallthru
          _
        %s244 = sand.u32 %s44, 1
        %s245 = scalar_lea.sflag [#allocation3], %s244
        %s246 = sand.u32 %s44, 1
        %s247 = smul.addr %s246, 4
        %s248 = scalar_lea.vmem [#allocation2], %s247
        %p249 = pneg %p57
        %p250 = pneg %p54
        %s251 = smul.u32 2, %s27
        %p252 = scmp.lt.s32.totalorder %s26, 1
        %s253 = scalar_select %p252, %s26, 1
        %p254 = scmp.lt.s32.totalorder %s251, 1
        %s255 = scalar_select %p254, %s251, 1
        %s256 = smul.addr %s253, 2
        %s257 = sadd.s32 %s255, %s256
        %s258 = smul.addr %s257, 8
        %s259 = scalar_lea.vmem %s1, %s258
        %p260 = pneg %p85
        %p261 = pneg %p82
        %p262 = pneg %p106
        %p263 = pneg %p103
        %p264 = pneg %p127
        %p265 = pneg %p124
        %p266 = pneg %p155
        %p267 = pneg %p152
        %s268 = sand.u32 %s142, 1
        %s269 = scalar_lea.sflag [#allocation4], %s268
        %s270 = sand.u32 %s142, 1
        %s271 = smul.addr %s270, 2
        %s272 = scalar_lea.vmem [#allocation7], %s271
        %s273 = smul.u32 2, %s27
        %s274 = smul.u32 2, %s27
        %p275 = scmp.lt.s32.totalorder %s26, 1
        %s276 = scalar_select %p275, %s26, 1
        %p277 = scmp.lt.s32.totalorder %s274, 1
        %s278 = scalar_select %p277, %s274, 1
        %s279 = smul.addr %s276, 2
        %s280 = sadd.s32 %s278, %s279
        %s281 = smul.addr %s280, 8
        %s282 = scalar_lea.vmem %s1, %s281
        %s283 = smul.u32 2, %s27
        %s284 = smul.u32 2, %s27
        %v286 = vld [vmem:[%s282] sm:$0xff]
        %v287 = vld [vmem:[%s282 + $0x8] sm:$0xff]
        %v288 = vld [vmem:[#allocation5] sm:$0xf]
        %v289 = vld [vmem:[#allocation5 + $0x4] sm:$0xf]
        %v290 = vld [vmem:[#allocation5 + $0x8] sm:$0xf]
        %v291 = vld [vmem:[#allocation5 + $0xc] sm:$0xf]
        %v292 = vld [vmem:[%s3] sm:$0xff]
        %v293 = vld [vmem:[%s3 + $0x8] sm:$0xff]
        %v294 = vld [vmem:[%s3 + $0x10] sm:$0xff]
        %v295 = vld [vmem:[%s3 + $0x18] sm:$0xff]
        %v296 = vpack.c.bf16 %v286, %v286
        %v297 = vpack.c.bf16 %v287, %v287
        %299 = vset.pattern.permute.xlu0 0
        %300 = vperm.xlu0 %299, %v292
        %v301 = vpop.permute.xlu0 %300
        %304 = vset.pattern.permute.xlu0 0
        %305 = vperm.xlu0 %304, %v293
        %v306 = vpop.permute.xlu0 %305
        %309 = vset.pattern.permute.xlu0 0
        %310 = vperm.xlu0 %309, %v294
        %v311 = vpop.permute.xlu0 %310
        %314 = vset.pattern.permute.xlu0 0
        %315 = vperm.xlu0 %314, %v295
        %v316 = vpop.permute.xlu0 %315
        %v322 = vunpack.c.l.b16 %v288
        %v323 = vunpack.c.l.b16 %v289
        %v324 = vunpack.c.l.b16 %v290
        %v325 = vunpack.c.l.b16 %v291
        %v326 = vpack.c.b16 %v323, %v322
        %v327 = vpack.c.b16 %v325, %v324
        %vm328 = vcmask 64512
        %v330 = vsel %vm328, %v326, 0
        %v333 = vsel %vm328, %v327, 0
        %vm335 = vcmask 1043456
        %v337 = vsel %vm335, %v296, 0
        %v340 = vsel %vm335, %v297, 0
        %342 = vmatprep.subr.bf16.mxu0 %v340
        %343 = vmatpush1.bf16.msra.mxu0 %v337
        %344 = vmatprep.subr.bf16.mxu0 0
        %345 = vmatpush1.bf16.msra.mxu0 0
        %346 = vmatprep.subr.bf16.mxu0 0
        %347 = vmatpush1.bf16.msra.mxu0 0
        %348 = vmatprep.subr.bf16.mxu0 0
        %349 = vmatpush1.bf16.msra.mxu0 0
        %350 = vmatprep.subr.bf16.mxu0 0
        %351 = vmatpush1.bf16.msra.mxu0 0
        %352 = vmatprep.subr.bf16.mxu0 0
        %353 = vmatpush1.bf16.msra.mxu0 0
        %354 = vmatprep.subr.bf16.mxu0 0
        %355 = vmatpush1.bf16.msra.mxu0 0
        %356 = vmatprep.subr.bf16.mxu0 0
        %357 = vmatpush1.bf16.msra.mxu0 0
        %358 = vmatprep.subr.bf16.mxu0 0
        %359 = vmatpush1.bf16.msra.mxu0 0
        %360 = vmatprep.subr.bf16.mxu0 0
        %361 = vmatpush1.bf16.msra.mxu0 0
        %362 = vmatprep.subr.bf16.mxu0 0
        %363 = vmatpush1.bf16.msra.mxu0 0
        %364 = vmatprep.subr.bf16.mxu0 0
        %365 = vmatpush1.bf16.msra.mxu0 0
        %366 = vmatprep.subr.bf16.mxu0 0
        %367 = vmatpush1.bf16.msra.mxu0 0
        %368 = vmatprep.subr.bf16.mxu0 0
        %369 = vmatpush1.bf16.msra.mxu0 0
        %370 = vmatprep.subr.bf16.mxu0 0
        %371 = vmatpush1.bf16.msra.mxu0 0
        %372 = vmatprep.subr.bf16.mxu0 0
        %373 = vmatpush1.bf16.msra.mxu0 0
        %374 = vmatprep.mubr.bf16.mxu0 0
        %375 = vmatmul.mubr.bf16.gmra.mrb[0].mxu0 %v330
        %v376 = vpop.f32.mrb[0].mxu0
        %v377 = vadd.f32 %v301, %v376
        %v378 = vpop.f32.mrb[0].mxu0
        %v379 = vadd.f32 %v301, %v378
        %v380 = vpop.f32.mrb[0].mxu0
        %v381 = vadd.f32 %v306, %v380
        %v382 = vpop.f32.mrb[0].mxu0
        %v383 = vadd.f32 %v306, %v382
        %384 = vmatprep.mubr.bf16.mxu0 0
        %385 = vmatmul.mubr.bf16.gmra.mrb[0].mxu0 %v333
        %v386 = vpop.f32.mrb[0].mxu0
        %v387 = vadd.f32 %v311, %v386
        %v388 = vpop.f32.mrb[0].mxu0
        %v389 = vadd.f32 %v311, %v388
        %v390 = vpop.f32.mrb[0].mxu0
        %v391 = vadd.f32 %v316, %v390
        %v392 = vpop.f32.mrb[0].mxu0
        %v393 = vadd.f32 %v316, %v392
        %394 = vdwg.mxu0
        %vm395 = vcmp.gt.f32.partialorder %v377, 0.0
        %vm396 = vcmp.gt.f32.partialorder %v379, 0.0
        %vm397 = vcmp.gt.f32.partialorder %v381, 0.0
        %vm398 = vcmp.gt.f32.partialorder %v383, 0.0
        %vm399 = vcmp.gt.f32.partialorder %v387, 0.0
        %vm400 = vcmp.gt.f32.partialorder %v389, 0.0
        %vm401 = vcmp.gt.f32.partialorder %v391, 0.0
        %vm402 = vcmp.gt.f32.partialorder %v393, 0.0
        %v403 = vmul.f32 %v377, 0.01
        %v404 = vmul.f32 %v379, 0.01
        %v405 = vmul.f32 %v381, 0.01
        %v406 = vmul.f32 %v383, 0.01
        %v407 = vmul.f32 %v387, 0.01
        %v408 = vmul.f32 %v389, 0.01
        %v409 = vmul.f32 %v391, 0.01
        %v410 = vmul.f32 %v393, 0.01
        %v411 = vsel %vm395, %v377, %v403
        %v412 = vsel %vm396, %v379, %v404
        %v413 = vsel %vm397, %v381, %v405
        %v414 = vsel %vm398, %v383, %v406
        %v415 = vsel %vm399, %v387, %v407
        %v416 = vsel %vm400, %v389, %v408
        %v417 = vsel %vm401, %v391, %v409
        %v418 = vsel %vm402, %v393, %v410
        %v419 = vpack.c.bf16 %v413, %v411
        %v420 = vpack.c.bf16 %v414, %v412
        %v421 = vpack.c.bf16 %v417, %v415
        %v422 = vpack.c.bf16 %v418, %v416
        %423 = vset.pattern.permute.xlu0 1
        %424 = vperm.xlu0 %423, %v292
        %v425 = vpop.permute.xlu0 %424
        %427 = vset.pattern.permute.xlu0 1
        %428 = vperm.xlu0 %427, %v293
        %v429 = vpop.permute.xlu0 %428
        %431 = vset.pattern.permute.xlu0 1
        %432 = vperm.xlu0 %431, %v294
        %v433 = vpop.permute.xlu0 %432
        %435 = vset.pattern.permute.xlu0 1
        %436 = vperm.xlu0 %435, %v295
        %v437 = vpop.permute.xlu0 %436
        %439 = vrot.lane.b32.xlu0 %v326, 120
        %v440 = vpop.permute.xlu0 %439
        %441 = vrot.lane.b32.xlu0 %v327, 120
        %v442 = vpop.permute.xlu0 %441
        %vm443 = vcmask 261120
        %v445 = vsel %vm443, %v440, 0
        %v448 = vsel %vm443, %v442, 0
        %450 = vmatprep.subr.bf16.mxu0 %v420
        %451 = vmatpush1.bf16.msra.mxu0 %v419
        %452 = vmatprep.subr.bf16.mxu0 %v422
        %453 = vmatpush1.bf16.msra.mxu0 %v421
        %454 = vmatprep.subr.bf16.mxu0 0
        %455 = vmatpush1.bf16.msra.mxu0 0
        %456 = vmatprep.subr.bf16.mxu0 0
        %457 = vmatpush1.bf16.msra.mxu0 0
        %458 = vmatprep.subr.bf16.mxu0 0
        %459 = vmatpush1.bf16.msra.mxu0 0
        %460 = vmatprep.subr.bf16.mxu0 0
        %461 = vmatpush1.bf16.msra.mxu0 0
        %462 = vmatprep.subr.bf16.mxu0 0
        %463 = vmatpush1.bf16.msra.mxu0 0
        %464 = vmatprep.subr.bf16.mxu0 0
        %465 = vmatpush1.bf16.msra.mxu0 0
        %466 = vmatprep.subr.bf16.mxu0 0
        %467 = vmatpush1.bf16.msra.mxu0 0
        %468 = vmatprep.subr.bf16.mxu0 0
        %469 = vmatpush1.bf16.msra.mxu0 0
        %470 = vmatprep.subr.bf16.mxu0 0
        %471 = vmatpush1.bf16.msra.mxu0 0
        %472 = vmatprep.subr.bf16.mxu0 0
        %473 = vmatpush1.bf16.msra.mxu0 0
        %474 = vmatprep.subr.bf16.mxu0 0
        %475 = vmatpush1.bf16.msra.mxu0 0
        %476 = vmatprep.subr.bf16.mxu0 0
        %477 = vmatpush1.bf16.msra.mxu0 0
        %478 = vmatprep.subr.bf16.mxu0 0
        %479 = vmatpush1.bf16.msra.mxu0 0
        %480 = vmatprep.subr.bf16.mxu0 0
        %481 = vmatpush1.bf16.msra.mxu0 0
        %482 = vmatprep.mubr.bf16.mxu0 0
        %483 = vmatmul.mubr.bf16.gmra.mrb[0].mxu0 %v445
        %v484 = vpop.f32.mrb[0].mxu0
        %v485 = vadd.f32 %v425, %v484
        %v486 = vpop.f32.mrb[0].mxu0
        %v487 = vadd.f32 %v425, %v486
        %v488 = vpop.f32.mrb[0].mxu0
        %v489 = vadd.f32 %v429, %v488
        %v490 = vpop.f32.mrb[0].mxu0
        %v491 = vadd.f32 %v429, %v490
        %492 = vmatprep.mubr.bf16.mxu0 0
        %493 = vmatmul.mubr.bf16.gmra.mrb[0].mxu0 %v448
        %v494 = vpop.f32.mrb[0].mxu0
        %v495 = vadd.f32 %v433, %v494
        %v496 = vpop.f32.mrb[0].mxu0
        %v497 = vadd.f32 %v433, %v496
        %v498 = vpop.f32.mrb[0].mxu0
        %v499 = vadd.f32 %v437, %v498
        %v500 = vpop.f32.mrb[0].mxu0
        %v501 = vadd.f32 %v437, %v500
        %502 = vdwg.mxu0
        %vm503 = vcmp.gt.f32.partialorder %v485, 0.0
        %vm504 = vcmp.gt.f32.partialorder %v487, 0.0
        %vm505 = vcmp.gt.f32.partialorder %v489, 0.0
        %vm506 = vcmp.gt.f32.partialorder %v491, 0.0
        %vm507 = vcmp.gt.f32.partialorder %v495, 0.0
        %vm508 = vcmp.gt.f32.partialorder %v497, 0.0
        %vm509 = vcmp.gt.f32.partialorder %v499, 0.0
        %vm510 = vcmp.gt.f32.partialorder %v501, 0.0
        %v511 = vmul.f32 %v485, 0.01
        %v512 = vmul.f32 %v487, 0.01
        %v513 = vmul.f32 %v489, 0.01
        %v514 = vmul.f32 %v491, 0.01
        %v515 = vmul.f32 %v495, 0.01
        %v516 = vmul.f32 %v497, 0.01
        %v517 = vmul.f32 %v499, 0.01
        %v518 = vmul.f32 %v501, 0.01
        %v519 = vsel %vm503, %v485, %v511
        %v520 = vsel %vm504, %v487, %v512
        %v521 = vsel %vm505, %v489, %v513
        %v522 = vsel %vm506, %v491, %v514
        %v523 = vsel %vm507, %v495, %v515
        %v524 = vsel %vm508, %v497, %v516
        %v525 = vsel %vm509, %v499, %v517
        %v526 = vsel %vm510, %v501, %v518
        %v527 = vpack.c.bf16 %v521, %v519
        %v528 = vpack.c.bf16 %v522, %v520
        %v529 = vpack.c.bf16 %v525, %v523
        %v530 = vpack.c.bf16 %v526, %v524
        %531 = vset.pattern.permute.xlu0 2
        %532 = vperm.xlu0 %531, %v292
        %v533 = vpop.permute.xlu0 %532
        %v535 = vpack.c.b16 %v322, %v322
        %536 = vrot.lane.b32.xlu0 %v535, 88
        %v537 = vpop.permute.xlu0 %536
        %v539 = vsel %vm443, %v537, 0
        %541 = vmatprep.subr.bf16.mxu0 %v528
        %542 = vmatpush1.bf16.msra.mxu0 %v527
        %543 = vmatprep.subr.bf16.mxu0 %v530
        %544 = vmatpush1.bf16.msra.mxu0 %v529
        %545 = vmatprep.subr.bf16.mxu0 0
        %546 = vmatpush1.bf16.msra.mxu0 0
        %547 = vmatprep.subr.bf16.mxu0 0
        %548 = vmatpush1.bf16.msra.mxu0 0
        %549 = vmatprep.subr.bf16.mxu0 0
        %550 = vmatpush1.bf16.msra.mxu0 0
        %551 = vmatprep.subr.bf16.mxu0 0
        %552 = vmatpush1.bf16.msra.mxu0 0
        %553 = vmatprep.subr.bf16.mxu0 0
        %554 = vmatpush1.bf16.msra.mxu0 0
        %555 = vmatprep.subr.bf16.mxu0 0
        %556 = vmatpush1.bf16.msra.mxu0 0
        %557 = vmatprep.subr.bf16.mxu0 0
        %558 = vmatpush1.bf16.msra.mxu0 0
        %559 = vmatprep.subr.bf16.mxu0 0
        %560 = vmatpush1.bf16.msra.mxu0 0
        %561 = vmatprep.subr.bf16.mxu0 0
        %562 = vmatpush1.bf16.msra.mxu0 0
        %563 = vmatprep.subr.bf16.mxu0 0
        %564 = vmatpush1.bf16.msra.mxu0 0
        %565 = vmatprep.subr.bf16.mxu0 0
        %566 = vmatpush1.bf16.msra.mxu0 0
        %567 = vmatprep.subr.bf16.mxu0 0
        %568 = vmatpush1.bf16.msra.mxu0 0
        %569 = vmatprep.subr.bf16.mxu0 0
        %570 = vmatpush1.bf16.msra.mxu0 0
        %571 = vmatprep.subr.bf16.mxu0 0
        %572 = vmatpush1.bf16.msra.mxu0 0
        %573 = vmatprep.mubr.bf16.mxu0 0
        %574 = vmatmul.mubr.bf16.gmra.mrb[0].mxu0 %v539
        %v575 = vpop.f32.mrb[0].mxu0
        %v576 = vadd.f32 %v533, %v575
        %v577 = vpop.f32.mrb[0].mxu0
        %v578 = vadd.f32 %v533, %v577
        %v579 = vpop.f32.mrb[0].mxu0
        %v580 = vpop.f32.mrb[0].mxu0
        %581 = vdwg.mxu0
        %v582 = vmax.f32 %v576, 0.0
        %v583 = vmax.f32 %v578, 0.0
        %v584 = vand.u32 2147483647, %v576
        %v585 = vand.u32 2147483647, %v578
        %v586 = vsub.f32 0.0, %v584
        %v587 = vsub.f32 0.0, %v585
        %v588 = vmul.f32 %v586, 1.442695
        %v589 = vpow.pop %v588
        %v590 = vmul.f32 %v587, 1.442695
        %v591 = vpow.pop %v590
        %v592 = vadd.f32 %v589, 1.0
        %v593 = vlog2.pop %v592
        %v594 = vmul.f32 %v593, 0.6931472
        %v595 = vmul.f32 -0.5, %v589
        %v596 = vadd.f32 %v595, 1.0
        %v597 = vmul.f32 %v596, %v589
        %v598 = vand.u32 2147483647, %v589
        %vm599 = vcmp.lt.f32.partialorder %v598, 0.0004427343
        %v600 = vsel %vm599, %v597, %v594
        %v601 = vadd.f32 %v591, 1.0
        %v602 = vlog2.pop %v601
        %v603 = vmul.f32 %v602, 0.6931472
        %v604 = vmul.f32 -0.5, %v591
        %v605 = vadd.f32 %v604, 1.0
        %v606 = vmul.f32 %v605, %v591
        %v607 = vand.u32 2147483647, %v591
        %vm608 = vcmp.lt.f32.partialorder %v607, 0.0004427343
        %v609 = vsel %vm608, %v606, %v603
        %v610 = vadd.f32 %v582, %v600
        %v611 = vadd.f32 %v583, %v609
        %v612 = vld [vmem:[%s235] sm:$0xf]
        %v615 = vcombine.low %v576, %v578
        %v617 = vunpack.c.l.s4 1983009808
        %v618 = vunpack.c.0.s8 %v617
        %v619 = vlaneseq
        %v620 = vshrl.u32 %v619, 7
        %v621 = vsub.s32 %v618, %v620
        %v622 = vrot.slane %v615, %v621
        %v624 = vsub.f32 %v612, %v622
        %v625 = vlog2.pop %v610
        %v626 = vmul.f32 %v625, 0.6931472
        %v627 = vlog2.pop %v611
        %v628 = vmul.f32 %v627, 0.6931472
        %v629 = vrcp.pop %v610
        %v630 = vrcp.pop %v611
        %v631 = vmul.f32 %v610, %v629
        %v632 = vmul.f32 %v611, %v630
        %v633 = vsub.f32 2.0, %v631
        %v634 = vsub.f32 2.0, %v632
        %v635 = vmul.f32 %v629, %v633
        %v636 = vmul.f32 %v630, %v634
        %v637 = vmul.f32 %v624, -0.5
        %v638 = vmul.f32 %v637, %v624
        %v639 = vmul.f32 %v635, %v635
        %v640 = vmul.f32 %v636, %v636
        %v643 = vcombine.low %v639, %v640
        %v645 = vunpack.c.l.s4 1983009808
        %v646 = vunpack.c.0.s8 %v645
        %v647 = vlaneseq
        %v648 = vshrl.u32 %v647, 7
        %v649 = vsub.s32 %v646, %v648
        %v650 = vrot.slane %v643, %v649
        %v651 = vcombine.high %v650, %v650
        %v653 = vmul.f32 %v638, %v651
        %v654 = vsub.f32 %v653, 0.9189385
        %v657 = vcombine.low %v626, %v628
        %v659 = vunpack.c.l.s4 1983009808
        %v660 = vunpack.c.0.s8 %v659
        %v661 = vlaneseq
        %v662 = vshrl.u32 %v661, 7
        %v663 = vsub.s32 %v660, %v662
        %v664 = vrot.slane %v657, %v663
        %v665 = vcombine.high %v664, %v664
        %v667 = vsub.f32 %v654, %v665
        %v670 = vunpack.c.l.s4 1983009808
        %v671 = vunpack.c.0.s8 %v670
        %v672 = vlaneseq
        %v673 = vshrl.u32 %v672, 7
        %v674 = vsub.s32 %v671, %v673
        %v675 = vrot.slane %v667, %v674
        %v676 = vcombine.high %v675, %v675
        %vm679 = vcmask 1041408
        %v680 = vsel %vm679, %v675, 0.0
        %v681 = vrot.slane %v680, 4
        %v682 = vadd.f32 %v680, %v681
        %v683 = vrot.slane %v682, 2
        %v684 = vadd.f32 %v682, %v683
        %v685 = vrot.slane %v684, 1
        %v686 = vadd.f32 %v684, %v685
        %v687 = vsel %vm679, %v676, 0.0
        %v688 = vrot.slane %v687, 4
        %v689 = vadd.f32 %v687, %v688
        %v690 = vrot.slane %v689, 2
        %v691 = vadd.f32 %v689, %v690
        %v692 = vrot.slane %v691, 1
        %v693 = vadd.f32 %v691, %v692
        %v696 = vcombine.low %v686, %v693
        %v698 = vunpack.c.l.s4 1966171168
        %v699 = vunpack.c.0.s8 %v698
        %v700 = vlaneseq
        %v701 = vshrl.u32 %v700, 7
        %v702 = vsub.s32 %v699, %v701
        %v703 = vrot.slane %v696, %v702
        %v705 = vunpack.c.l.s4 1966171168
        %v706 = vunpack.c.0.s8 %v705
        %v707 = vlaneseq
        %v708 = vshrl.u32 %v707, 7
        %v709 = vsub.s32 %v706, %v708
        %v710 = vrot.slane %v703, %v709
        %v712 = vlaneseq
        %vm713 = vcmp.ge.s32.totalorder %v712, 0
        %vm714 = vcmp.lt.s32.totalorder %v712, 256
        %vm715 = vmand %vm713, %vm714
        %716 = vst.msk [vmem:[%s272] sm:$0x3] %vm715, %v710
        %s717 = sand.u32 %s142, 1
        %s718 = scalar_lea.sflag [#allocation4], %s717
        %s719 = sand.u32 %s142, 1
        %s720 = smul.addr %s719, 2
        %s721 = scalar_lea.vmem [#allocation7], %s720
        // Predicated region
        $region45: #{_logp_pallas.1} parent=35 // pred_check
          %p722 = pneg %p152
        $region46: #{_logp_pallas.1} parent=35 // pred_check_branch
          %724 = sbr.rel (%p722) target = $region48
        $region47: #{_logp_pallas.1} parent=35 // pred_region
          %s725 = smul.u32 2, %s27
          %s727 = ssub.s32 32, 32
          %728 = vsyncadd %s718, %s727
          %s729 = smul.addr %s26, 2
          %s730 = sadd.s32 %s725, %s729
          %s731 = smul.addr %s730, 16
          %s732 = scalar_lea.hbm %s4, %s731
          %s734 = sshll.u32 %s721, 4
          %s735 = int_to_ptr.vmem [resolvable:$true] %s734
          %737 = dma.vmem_to_hbm [thread:$0]  %s735, 32, %s732, %s718
        $region48: #{_logp_pallas.1} parent=35 // pred_fallthru
          _
      $region36: #{_logp_pallas.1} parent=5 // pred_fallthru
        _
      %p738 = scmp.le.s32.totalorder 2, %s17
      // Predicated region
      $region49: #{_logp_pallas.1} parent=5 // pred_check
        %p739 = pneg %p738
      $region50: #{_logp_pallas.1} parent=5 // pred_check_branch
        %741 = sbr.rel (%p739) target = $region52
      $region51: #{_logp_pallas.1} parent=5 // pred_region
        %s742 = ssub.s32 %s17, 2
        // Predicated region
        $region53: #{_logp_pallas.1} parent=51 // pred_check
          %p743 = pneg %p158
        $region54: #{_logp_pallas.1} parent=51 // pred_check_branch
          %745 = sbr.rel (%p743) target = $region56
        $region55: #{_logp_pallas.1} parent=51 // pred_region
          %s746 = sand.u32 %s143, 1
          %s747 = scalar_lea.sflag [#allocation4], %s746
          %s748 = sand.u32 %s143, 1
          %s749 = smul.addr %s748, 2
          %s750 = scalar_lea.vmem [#allocation7], %s749
          %751 = dma.done %s747, 32
        $region56: #{_logp_pallas.1} parent=51 // pred_fallthru
          _
      $region52: #{_logp_pallas.1} parent=5 // pred_fallthru
        _
    $region6: #{_logp_pallas.1} parent=1 // loop_footer
      %s21 = sadd.s32 1, %s17
    $region7: #{_logp_pallas.1} parent=1 // loop_footer_branch
      %16 = sbr.rel target = $region3
    $region8: #{_logp_pallas.1} parent=1 // loop_exit
      _
    %752 = vsyncpa [#allocation3], 1
    %s753 = scalar_lea.sflag [#allocation3], 1
    %754 = vsyncpa %s753, 1
    %755 = vsyncpa [#allocation6], 1
    %756 = vsyncpa [#allocation4], 1
    %s757 = scalar_lea.sflag [#allocation4], 1
    %758 = vsyncpa %s757, 1

</llo_original>
